<compile_context>
chip_gen: v7x
topology: tpu7x:2x2x1
jax: 0.10.0
libtpu: 0.0.40
codegen_flags: <defaults>
</compile_context>

<pallas_src>
import functools

import jax
import jax.numpy as jnp
from jax import lax
from jax.experimental import pallas as pl
from jax.experimental.pallas import tpu as pltpu


def _addbn_kernel(x1_ref, x2_ref, gamma_ref, beta_ref, c_ref, out_ref,
                  sum_acc, sq_acc, scale_sc, shift_sc, *opt_scratch,
                  m_total, mf_total, e_orig, k_fold, tile_rows, eps,
                  needs_mask, resident):
    """Fused add + BatchNorm1d (training stats). grid = (phase, row_tile)."""
    phase = pl.program_id(0)
    i = pl.program_id(1)
    n_i = pl.num_programs(1)
    added_buf = opt_scratch[0] if resident else None

    def row_start():
        s = i * tile_rows
        if tile_rows % 8 == 0:
            s = pl.multiple_of(s, 8)
        return s

    # ------------------------- phase 0: batch statistics -------------------
    @pl.when(phase == 0)
    def _stats():
        @pl.when(i == 0)
        def _():
            sum_acc[...] = jnp.zeros_like(sum_acc)
            sq_acc[...] = jnp.zeros_like(sq_acc)

        s_native = x1_ref[...] + x2_ref[...]              # native-dtype add (== torch)
        if resident:
            added_buf[pl.ds(row_start(), tile_rows), :] = s_native
        xc = s_native.astype(jnp.float32) - c_ref[...]    # centered (stable variance)

        def accumulate(v):
            if tile_rows % 8 == 0:
                # vreg-aligned (8, L) partials: pure VPU adds in the hot loop.
                vr = v.reshape(tile_rows // 8, 8, v.shape[-1])
                sum_acc[...] += jnp.sum(vr, axis=0)
                sq_acc[...] += jnp.sum(vr * vr, axis=0)
            else:  # only possible when the whole array is a single tile
                sum_acc[0:1, :] += jnp.sum(v, axis=0, keepdims=True)
                sq_acc[0:1, :] += jnp.sum(v * v, axis=0, keepdims=True)

        if needs_mask:
            is_last = i == n_i - 1

            @pl.when(is_last)
            def _():
                valid = mf_total - i * tile_rows
                row = lax.broadcasted_iota(jnp.int32, (tile_rows, 1), 0)
                accumulate(jnp.where(row < valid, xc, 0.0))

            @pl.when(jnp.logical_not(is_last))
            def _():
                accumulate(xc)
        else:
            accumulate(xc)

        @pl.when(i == n_i - 1)
        def _finalize():
            s8 = sum_acc[...]
            q8 = sq_acc[...]
            if k_fold > 1:
                # Fold the k lane-replicas of every feature; after summing all k
                # cyclic shifts, every lane holds the full per-feature total.
                s8t, q8t = s8, q8
                for r in range(1, k_fold):
                    s8t = s8t + pltpu.roll(s8, r * e_orig, axis=1)
                    q8t = q8t + pltpu.roll(q8, r * e_orig, axis=1)
                s8, q8 = s8t, q8t
            s = jnp.sum(s8, axis=0, keepdims=True)        # (1, L)
            q = jnp.sum(q8, axis=0, keepdims=True)
            inv_m = jnp.float32(1.0 / m_total)
            d = s * inv_m                                  # E[x] - c
            mean = c_ref[...] + d
            var = jnp.maximum(q * inv_m - d * d, 0.0)      # biased (training-mode BN)
            sc = gamma_ref[...] * lax.rsqrt(var + jnp.float32(eps))
            scale_sc[...] = sc
            shift_sc[...] = beta_ref[...] - mean * sc

    # ------------------------- phase 1: normalize ---------------------------
    @pl.when(phase == 1)
    def _apply():
        if resident:
            a = added_buf[pl.ds(row_start(), tile_rows), :].astype(jnp.float32)
        else:
            a = (x1_ref[...] + x2_ref[...]).astype(jnp.float32)
        out_ref[...] = (a * scale_sc[...] + shift_sc[...]).astype(out_ref.dtype)


def add_and_batch_norm(input1, input2, gamma, beta, *, eps=1e-5,
                       block_bytes=1 << 20, tile_rows=None,
                       fused_vmem_budget=36 << 20):
    """Pallas implementation of AddAndBatchNormalization.forward (training BN)."""
    assert input1.shape == input2.shape
    orig_shape = input1.shape
    E = int(orig_shape[-1])
    M = 1
    for s in orig_shape[:-1]:
        M *= int(s)

    add_dtype = jnp.result_type(input1.dtype, input2.dtype)
    out_dtype = add_dtype
    x1 = input1.reshape(M, E).astype(add_dtype)
    x2 = input2.reshape(M, E).astype(add_dtype)

    # ---- lane folding: pack k rows into the 128-wide lane axis when E < 128.
    k = 1
    if E < 128 and 128 % E == 0:
        k = 128 // E
        while k > 1 and M % k != 0:
            k //= 2
    L = k * E
    Mf = M // k
    x1f = x1.reshape(Mf, L)
    x2f = x2.reshape(Mf, L)

    gamma_t = jnp.tile(gamma.astype(jnp.float32).reshape(-1), (k,)).reshape(1, L)
    beta_t = jnp.tile(beta.astype(jnp.float32).reshape(-1), (k,)).reshape(1, L)

    # Centering estimate from a few leading rows (tiny XLA op) — makes the
    # E[(x-c)^2] - (E[x-c])^2 variance numerically well conditioned.
    nc = min(M, 64)
    c = jnp.mean(x1[:nc].astype(jnp.float32) + x2[:nc].astype(jnp.float32), axis=0)
    c_t = jnp.tile(c, (k,)).reshape(1, L)

    # ---- row tile (aim for ~1 MiB native-dtype input blocks).
    in_itemsize = jnp.dtype(add_dtype).itemsize
    out_itemsize = jnp.dtype(out_dtype).itemsize
    if tile_rows is None:
        tile_rows = max(8, (block_bytes // (L * in_itemsize)) // 8 * 8)
    else:
        tile_rows = max(8, (int(tile_rows) // 8) * 8)
    if tile_rows >= Mf:
        tile_rows = Mf
    grid_m = pl.cdiv(Mf, tile_rows)
    needs_mask = (Mf % tile_rows) != 0

    # ---- VMEM budgeting: keep the `added` tensor resident when it fits.
    in_block = tile_rows * L * in_itemsize
    out_block = tile_rows * L * out_itemsize
    f32_tile = tile_rows * L * 4
    resident_bytes = grid_m * tile_rows * L * in_itemsize
    base_vmem = (2 * (2 * in_block)      # x1/x2 double-buffered
                 + 2 * out_block         # output double-buffered
                 + 4 * f32_tile          # elementwise temporaries headroom
                 + 4 * 8 * L * 4 + 4 * L * 4)
    resident = (base_vmem + resident_bytes) <= fused_vmem_budget
    vmem_est = base_vmem + (resident_bytes if resident else 0)
    vmem_limit = int(min(48 << 20, max(32 << 20, vmem_est + (8 << 20))))

    # ---- block specs: inputs stream only in the phase that needs them.
    if resident:
        in_map = lambda p, i: (i * (1 - p), 0)   # phase 1: pinned, no re-streaming
    else:
        in_map = lambda p, i: (i, 0)             # phase 1 recomputes x1+x2
    out_map = lambda p, i: (i * p, 0)            # no output writeback in phase 0
    vec_map = lambda p, i: (0, 0)

    in_spec = pl.BlockSpec((tile_rows, L), in_map)
    vec_spec = pl.BlockSpec((1, L), vec_map)
    out_spec = pl.BlockSpec((tile_rows, L), out_map)

    scratch = [pltpu.VMEM((8, L), jnp.float32),   # sum accumulator
               pltpu.VMEM((8, L), jnp.float32),   # sum-of-squares accumulator
               pltpu.VMEM((1, L), jnp.float32),   # fused scale
               pltpu.VMEM((1, L), jnp.float32)]   # fused shift
    if resident:
        scratch.append(pltpu.VMEM((grid_m * tile_rows, L), add_dtype))

    kernel = functools.partial(
        _addbn_kernel, m_total=M, mf_total=Mf, e_orig=E, k_fold=k,
        tile_rows=tile_rows, eps=float(eps), needs_mask=needs_mask,
        resident=resident)

    out = pl.pallas_call(
        kernel,
        out_shape=jax.ShapeDtypeStruct((Mf, L), out_dtype),
        grid_spec=pltpu.PrefetchScalarGridSpec(
            num_scalar_prefetch=0,
            grid=(2, grid_m),
            in_specs=[in_spec, in_spec, vec_spec, vec_spec, vec_spec],
            out_specs=out_spec,
            scratch_shapes=scratch),
        compiler_params=pltpu.CompilerParams(
            dimension_semantics=("arbitrary", "arbitrary"),
            vmem_limit_bytes=vmem_limit),
    )(x1f, x2f, gamma_t, beta_t, c_t)

    return out.reshape(orig_shape)


def reference_forward(input1, input2, gamma, beta, eps=1e-5):
    """Pure-JAX mirror of the PyTorch forward (BatchNorm1d, training-mode stats)."""
    E = input1.shape[-1]
    added = (input1 + input2).reshape(-1, E)               # native-dtype add
    x = added.astype(jnp.float32)
    mean = jnp.mean(x, axis=0)
    var = jnp.mean((x - mean) ** 2, axis=0)                # biased variance
    y = (x - mean) / jnp.sqrt(var + eps) * gamma.astype(jnp.float32) \
        + beta.astype(jnp.float32)
    return y.astype(added.dtype).reshape(input1.shape)


if __name__ == "__main__":
    key = jax.random.PRNGKey(0)
    k1, k2, k3, k4 = jax.random.split(key, 4)

    # Case 1: f32, fused resident path, multi-step grid, lane folding
    # (E=32 folds 4 rows -> 128 lanes; M = 4*64 = 256 rows, Mf = 64, tile 16).
    B, N, E = 4, 64, 32
    x1 = jax.random.normal(k1, (B, N, E), jnp.float32) + 1.5   # nonzero mean
    x2 = jax.random.normal(k2, (B, N, E), jnp.float32)
    gamma = 1.0 + 0.1 * jax.random.normal(k3, (E,), jnp.float32)
    beta = 0.1 * jax.random.normal(k4, (E,), jnp.float32)

    out = add_and_batch_norm(x1, x2, gamma, beta, tile_rows=16)
    out = jax.block_until_ready(out)
    ref = reference_forward(x1, x2, gamma, beta)
    assert out.shape == x1.shape
    assert bool(jnp.all(jnp.isfinite(out)))
    assert bool(jnp.allclose(out, ref, atol=2e-4, rtol=2e-4))

    # Case 2: streaming fallback path (resident buffer disabled) with a ragged
    # tail (M=120 -> Mf=30 folded rows, tile 16 -> masked last step).
    B2, N2 = 5, 24
    y1 = jax.random.normal(k1, (B2, N2, E), jnp.float32)
    y2 = jax.random.normal(k2, (B2, N2, E), jnp.float32)
    out2 = add_and_batch_norm(y1, y2, gamma, beta, tile_rows=16,
                              fused_vmem_budget=0)
    out2 = jax.block_until_ready(out2)
    ref2 = reference_forward(y1, y2, gamma, beta)
    assert bool(jnp.allclose(out2, ref2, atol=2e-4, rtol=2e-4))

    # Case 3: bf16 I/O (native-dtype reads/writes, f32 statistics inside).
    z1 = x1.astype(jnp.bfloat16)
    z2 = x2.astype(jnp.bfloat16)
    out3 = add_and_batch_norm(z1, z2, gamma, beta)
    out3 = jax.block_until_ready(out3)
    ref3 = reference_forward(z1, z2, gamma, beta)
    assert out3.dtype == jnp.bfloat16
    assert bool(jnp.allclose(out3.astype(jnp.float32), ref3.astype(jnp.float32),
                             atol=3e-2, rtol=3e-2))

    print("KERNEL_OK")
</pallas_src>

<mosaic_0001>
module attributes {stable_mosaic.version = 11 : i64} {
  func.func @_addbn_kernel(%arg0: i32, %arg1: i32, %arg2: memref<16x128xf32, #tpu.memory_space<vmem>>, %arg3: memref<16x128xf32, #tpu.memory_space<vmem>>, %arg4: memref<1x128xf32, #tpu.memory_space<vmem>>, %arg5: memref<1x128xf32, #tpu.memory_space<vmem>>, %arg6: memref<1x128xf32, #tpu.memory_space<vmem>>, %arg7: memref<16x128xf32, #tpu.memory_space<vmem>>, %arg8: memref<8x128xf32, #tpu.memory_space<vmem>>, %arg9: memref<8x128xf32, #tpu.memory_space<vmem>>, %arg10: memref<1x128xf32, #tpu.memory_space<vmem>>, %arg11: memref<1x128xf32, #tpu.memory_space<vmem>>, %arg12: memref<64x128xf32, #tpu.memory_space<vmem>>) attributes {dimension_semantics = [#tpu.dimension_semantics<arbitrary>, #tpu.dimension_semantics<arbitrary>], iteration_bounds = array<i64: 2, 4>, scalar_prefetch = 0 : i64, scratch_operands = 5 : i64, tpu.core_type = #tpu.core_type<tc>, window_params = [{transform_indices = @transform_0, window_bounds = array<i64: 16, 128>}, {transform_indices = @transform_1, window_bounds = array<i64: 16, 128>}, {pipeline_mode = #tpu.pipeline_mode<synchronous>, transform_indices = @transform_2, window_bounds = array<i64: 1, 128>}, {pipeline_mode = #tpu.pipeline_mode<synchronous>, transform_indices = @transform_3, window_bounds = array<i64: 1, 128>}, {pipeline_mode = #tpu.pipeline_mode<synchronous>, transform_indices = @transform_4, window_bounds = array<i64: 1, 128>}, {transform_indices = @transform_5, window_bounds = array<i64: 16, 128>}]} {
    %c0_i32 = arith.constant 0 : i32
    %0 = arith.cmpi eq, %arg0, %c0_i32 : i32
    %1 = arith.extui %0 : i1 to i32
    %c0_i32_0 = arith.constant 0 : i32
    %2 = arith.cmpi ne, %1, %c0_i32_0 : i32
    scf.if %2 {
      %c0_i32_2 = arith.constant 0 : i32
      %6 = arith.cmpi eq, %arg1, %c0_i32_2 : i32
      %7 = arith.extui %6 : i1 to i32
      %c0_i32_3 = arith.constant 0 : i32
      %8 = arith.cmpi ne, %7, %c0_i32_3 : i32
      scf.if %8 {
        %cst_20 = arith.constant 0.000000e+00 : f32
        %32 = vector.broadcast %cst_20 : f32 to vector<8x128xf32>
        %c0_21 = arith.constant 0 : index
        %c0_22 = arith.constant 0 : index
        %33 = vector.load %arg8[%c0_21, %c0_22] : memref<8x128xf32, #tpu.memory_space<vmem>>, vector<8x128xf32>
        tpu.vector_store %arg8[%c0_21, %c0_22], %32 {strides = array<i32>} : memref<8x128xf32, #tpu.memory_space<vmem>>, vector<8x128xf32>,
        %cst_23 = arith.constant 0.000000e+00 : f32
        %34 = vector.broadcast %cst_23 : f32 to vector<8x128xf32>
        %c0_24 = arith.constant 0 : index
        %c0_25 = arith.constant 0 : index
        %35 = vector.load %arg9[%c0_24, %c0_25] : memref<8x128xf32, #tpu.memory_space<vmem>>, vector<8x128xf32>
        tpu.vector_store %arg9[%c0_24, %c0_25], %34 {strides = array<i32>} : memref<8x128xf32, #tpu.memory_space<vmem>>, vector<8x128xf32>,
      } else {
      }
      %c0 = arith.constant 0 : index
      %c0_4 = arith.constant 0 : index
      %9 = vector.load %arg2[%c0, %c0_4] : memref<16x128xf32, #tpu.memory_space<vmem>>, vector<16x128xf32>
      %c0_5 = arith.constant 0 : index
      %c0_6 = arith.constant 0 : index
      %10 = vector.load %arg3[%c0_5, %c0_6] : memref<16x128xf32, #tpu.memory_space<vmem>>, vector<16x128xf32>
      %11 = arith.addf %9, %10 : vector<16x128xf32>
      %c16_i32 = arith.constant 16 : i32
      %12 = arith.muli %arg1, %c16_i32 : i32
      %13 = tpu.assume_multiple %12, 8 : i32
      %14 = arith.index_cast %13 : i32 to index
      %c0_7 = arith.constant 0 : index
      %15 = vector.load %arg12[%14, %c0_7] : memref<64x128xf32, #tpu.memory_space<vmem>>, vector<16x128xf32>
      tpu.vector_store %arg12[%14, %c0_7], %11 {strides = array<i32>} : memref<64x128xf32, #tpu.memory_space<vmem>>, vector<16x128xf32>,
      %c0_8 = arith.constant 0 : index
      %c0_9 = arith.constant 0 : index
      %16 = vector.load %arg6[%c0_8, %c0_9] : memref<1x128xf32, #tpu.memory_space<vmem>>, vector<1x128xf32>
      %17 = vector.broadcast %16 : vector<1x128xf32> to vector<16x128xf32>
      %18 = arith.subf %11, %17 : vector<16x128xf32>
      %19 = vector.shape_cast %18 : vector<16x128xf32> to vector<2x8x128xf32>
      %c0_10 = arith.constant 0 : index
      %c0_11 = arith.constant 0 : index
      %20 = vector.load %arg8[%c0_10, %c0_11] : memref<8x128xf32, #tpu.memory_space<vmem>>, vector<8x128xf32>
      %cst = arith.constant dense<0.000000e+00> : vector<8x128xf32>
      %21 = vector.multi_reduction <add>, %19, %cst [0] : vector<2x8x128xf32> to vector<8x128xf32>
      %22 = arith.addf %20, %21 : vector<8x128xf32>
      %c0_12 = arith.constant 0 : index
      %c0_13 = arith.constant 0 : index
      %23 = vector.load %arg8[%c0_12, %c0_13] : memref<8x128xf32, #tpu.memory_space<vmem>>, vector<8x128xf32>
      tpu.vector_store %arg8[%c0_12, %c0_13], %22 {strides = array<i32>} : memref<8x128xf32, #tpu.memory_space<vmem>>, vector<8x128xf32>,
      %c0_14 = arith.constant 0 : index
      %c0_15 = arith.constant 0 : index
      %24 = vector.load %arg9[%c0_14, %c0_15] : memref<8x128xf32, #tpu.memory_space<vmem>>, vector<8x128xf32>
      %25 = arith.mulf %19, %19 : vector<2x8x128xf32>
      %cst_16 = arith.constant dense<0.000000e+00> : vector<8x128xf32>
      %26 = vector.multi_reduction <add>, %25, %cst_16 [0] : vector<2x8x128xf32> to vector<8x128xf32>
      %27 = arith.addf %24, %26 : vector<8x128xf32>
      %c0_17 = arith.constant 0 : index
      %c0_18 = arith.constant 0 : index
      %28 = vector.load %arg9[%c0_17, %c0_18] : memref<8x128xf32, #tpu.memory_space<vmem>>, vector<8x128xf32>
      tpu.vector_store %arg9[%c0_17, %c0_18], %27 {strides = array<i32>} : memref<8x128xf32, #tpu.memory_space<vmem>>, vector<8x128xf32>,
      %c3_i32 = arith.constant 3 : i32
      %29 = arith.cmpi eq, %arg1, %c3_i32 : i32
      %30 = arith.extui %29 : i1 to i32
      %c0_i32_19 = arith.constant 0 : i32
      %31 = arith.cmpi ne, %30, %c0_i32_19 : i32
      scf.if %31 {
        %c0_20 = arith.constant 0 : index
        %c0_21 = arith.constant 0 : index
        %32 = vector.load %arg8[%c0_20, %c0_21] : memref<8x128xf32, #tpu.memory_space<vmem>>, vector<8x128xf32>
        %c0_22 = arith.constant 0 : index
        %c0_23 = arith.constant 0 : index
        %33 = vector.load %arg9[%c0_22, %c0_23] : memref<8x128xf32, #tpu.memory_space<vmem>>, vector<8x128xf32>
        %c32_i32 = arith.constant 32 : i32
        %34 = tpu.dynamic_rotate %32 by %c32_i32 dim 1 : vector<8x128xf32>, i32 -> vector<8x128xf32>
        %35 = arith.addf %32, %34 : vector<8x128xf32>
        %c32_i32_24 = arith.constant 32 : i32
        %36 = tpu.dynamic_rotate %33 by %c32_i32_24 dim 1 : vector<8x128xf32>, i32 -> vector<8x128xf32>
        %37 = arith.addf %33, %36 : vector<8x128xf32>
        %c64_i32 = arith.constant 64 : i32
        %38 = tpu.dynamic_rotate %32 by %c64_i32 dim 1 : vector<8x128xf32>, i32 -> vector<8x128xf32>
        %39 = arith.addf %35, %38 : vector<8x128xf32>
        %c64_i32_25 = arith.constant 64 : i32
        %40 = tpu.dynamic_rotate %33 by %c64_i32_25 dim 1 : vector<8x128xf32>, i32 -> vector<8x128xf32>
        %41 = arith.addf %37, %40 : vector<8x128xf32>
        %c96_i32 = arith.constant 96 : i32
        %42 = tpu.dynamic_rotate %32 by %c96_i32 dim 1 : vector<8x128xf32>, i32 -> vector<8x128xf32>
        %43 = arith.addf %39, %42 : vector<8x128xf32>
        %c96_i32_26 = arith.constant 96 : i32
        %44 = tpu.dynamic_rotate %33 by %c96_i32_26 dim 1 : vector<8x128xf32>, i32 -> vector<8x128xf32>
        %45 = arith.addf %41, %44 : vector<8x128xf32>
        %cst_27 = arith.constant dense<0.000000e+00> : vector<128xf32>
        %46 = vector.multi_reduction <add>, %43, %cst_27 [0] : vector<8x128xf32> to vector<128xf32>
        %47 = vector.shape_cast %46 : vector<128xf32> to vector<1x128xf32>
        %cst_28 = arith.constant dense<0.000000e+00> : vector<128xf32>
        %48 = vector.multi_reduction <add>, %45, %cst_28 [0] : vector<8x128xf32> to vector<128xf32>
        %49 = vector.shape_cast %48 : vector<128xf32> to vector<1x128xf32>
        %cst_29 = arith.constant 3.906250e-03 : f32
        %50 = vector.broadcast %cst_29 : f32 to vector<1x128xf32>
        %51 = arith.mulf %47, %50 : vector<1x128xf32>
        %c0_30 = arith.constant 0 : index
        %c0_31 = arith.constant 0 : index
        %52 = vector.load %arg6[%c0_30, %c0_31] : memref<1x128xf32, #tpu.memory_space<vmem>>, vector<1x128xf32>
        %53 = arith.addf %52, %51 : vector<1x128xf32>
        %cst_32 = arith.constant 3.906250e-03 : f32
        %54 = vector.broadcast %cst_32 : f32 to vector<1x128xf32>
        %55 = arith.mulf %49, %54 : vector<1x128xf32>
        %56 = arith.mulf %51, %51 : vector<1x128xf32>
        %57 = arith.subf %55, %56 : vector<1x128xf32>
        %cst_33 = arith.constant 0.000000e+00 : f32
        %58 = vector.broadcast %cst_33 : f32 to vector<1x128xf32>
        %59 = arith.maximumf %57, %58 : vector<1x128xf32>
        %c0_34 = arith.constant 0 : index
        %c0_35 = arith.constant 0 : index
        %60 = vector.load %arg4[%c0_34, %c0_35] : memref<1x128xf32, #tpu.memory_space<vmem>>, vector<1x128xf32>
        %cst_36 = arith.constant 9.99999974E-6 : f32
        %61 = vector.broadcast %cst_36 : f32 to vector<1x128xf32>
        %62 = arith.addf %59, %61 : vector<1x128xf32>
        %63 = math.rsqrt %62 : vector<1x128xf32>
        %64 = arith.mulf %60, %63 : vector<1x128xf32>
        %c0_37 = arith.constant 0 : index
        %c0_38 = arith.constant 0 : index
        %65 = vector.load %arg10[%c0_37, %c0_38] : memref<1x128xf32, #tpu.memory_space<vmem>>, vector<1x128xf32>
        tpu.vector_store %arg10[%c0_37, %c0_38], %64 {strides = array<i32>} : memref<1x128xf32, #tpu.memory_space<vmem>>, vector<1x128xf32>,
        %c0_39 = arith.constant 0 : index
        %c0_40 = arith.constant 0 : index
        %66 = vector.load %arg5[%c0_39, %c0_40] : memref<1x128xf32, #tpu.memory_space<vmem>>, vector<1x128xf32>
        %67 = arith.mulf %53, %64 : vector<1x128xf32>
        %68 = arith.subf %66, %67 : vector<1x128xf32>
        %c0_41 = arith.constant 0 : index
        %c0_42 = arith.constant 0 : index
        %69 = vector.load %arg11[%c0_41, %c0_42] : memref<1x128xf32, #tpu.memory_space<vmem>>, vector<1x128xf32>
        tpu.vector_store %arg11[%c0_41, %c0_42], %68 {strides = array<i32>} : memref<1x128xf32, #tpu.memory_space<vmem>>, vector<1x128xf32>,
      } else {
      }
    } else {
    }
    %c1_i32 = arith.constant 1 : i32
    %3 = arith.cmpi eq, %arg0, %c1_i32 : i32
    %4 = arith.extui %3 : i1 to i32
    %c0_i32_1 = arith.constant 0 : i32
    %5 = arith.cmpi ne, %4, %c0_i32_1 : i32
    scf.if %5 {
      %c16_i32 = arith.constant 16 : i32
      %6 = arith.muli %arg1, %c16_i32 : i32
      %7 = tpu.assume_multiple %6, 8 : i32
      %8 = arith.index_cast %7 : i32 to index
      %c0 = arith.constant 0 : index
      %9 = vector.load %arg12[%8, %c0] : memref<64x128xf32, #tpu.memory_space<vmem>>, vector<16x128xf32>
      %c0_2 = arith.constant 0 : index
      %c0_3 = arith.constant 0 : index
      %10 = vector.load %arg10[%c0_2, %c0_3] : memref<1x128xf32, #tpu.memory_space<vmem>>, vector<1x128xf32>
      %11 = vector.broadcast %10 : vector<1x128xf32> to vector<16x128xf32>
      %12 = arith.mulf %9, %11 : vector<16x128xf32>
      %c0_4 = arith.constant 0 : index
      %c0_5 = arith.constant 0 : index
      %13 = vector.load %arg11[%c0_4, %c0_5] : memref<1x128xf32, #tpu.memory_space<vmem>>, vector<1x128xf32>
      %14 = vector.broadcast %13 : vector<1x128xf32> to vector<16x128xf32>
      %15 = arith.addf %12, %14 : vector<16x128xf32>
      %c0_6 = arith.constant 0 : index
      %c0_7 = arith.constant 0 : index
      %16 = vector.load %arg7[%c0_6, %c0_7] : memref<16x128xf32, #tpu.memory_space<vmem>>, vector<16x128xf32>
      tpu.vector_store %arg7[%c0_6, %c0_7], %15 {strides = array<i32>} : memref<16x128xf32, #tpu.memory_space<vmem>>, vector<16x128xf32>,
    } else {
    }
    return
  }
  func.func @transform_0(%arg0: i32, %arg1: i32) -> (i32, i32) {
    %c1_i32 = arith.constant 1 : i32
    %0 = arith.subi %c1_i32, %arg0 : i32
    %1 = arith.muli %arg1, %0 : i32
    %c0_i32 = arith.constant 0 : i32
    %c0_i32_0 = arith.constant 0 : i32
    return %1, %c0_i32 : i32, i32
  }
  func.func @transform_1(%arg0: i32, %arg1: i32) -> (i32, i32) {
    %c1_i32 = arith.constant 1 : i32
    %0 = arith.subi %c1_i32, %arg0 : i32
    %1 = arith.muli %arg1, %0 : i32
    %c0_i32 = arith.constant 0 : i32
    %c0_i32_0 = arith.constant 0 : i32
    return %1, %c0_i32 : i32, i32
  }
  func.func @transform_2(%arg0: i32, %arg1: i32) -> (i32, i32) {
    %c0_i32 = arith.constant 0 : i32
    %c0_i32_0 = arith.constant 0 : i32
    %c0_i32_1 = arith.constant 0 : i32
    return %c0_i32, %c0_i32_0 : i32, i32
  }
  func.func @transform_3(%arg0: i32, %arg1: i32) -> (i32, i32) {
    %c0_i32 = arith.constant 0 : i32
    %c0_i32_0 = arith.constant 0 : i32
    %c0_i32_1 = arith.constant 0 : i32
    return %c0_i32, %c0_i32_0 : i32, i32
  }
  func.func @transform_4(%arg0: i32, %arg1: i32) -> (i32, i32) {
    %c0_i32 = arith.constant 0 : i32
    %c0_i32_0 = arith.constant 0 : i32
    %c0_i32_1 = arith.constant 0 : i32
    return %c0_i32, %c0_i32_0 : i32, i32
  }
  func.func @transform_5(%arg0: i32, %arg1: i32) -> (i32, i32) {
    %0 = arith.muli %arg1, %arg0 : i32
    %c0_i32 = arith.constant 0 : i32
    %c0_i32_0 = arith.constant 0 : i32
    return %0, %c0_i32 : i32, i32
  }
}

</mosaic_0001>

<llo_original>
// kernel: tpu_custom_call.1
$region0: #{tpu_custom_call.1}
  #allocation0 [shape = 'u32[]', space=smem, size = 0x4, offset = 0x4, fixed_abs, tag = 'smem constant byte address 0x4 - core index']
  #allocation1 [shape = 'u32[144,128]{1,0:T(1,128)}', space=vmem, size = 0x12000, scoped, tag = 'internal scratch']
  #allocation2 [shape = 'f32[8,128]{1,0:T(8,128)}', space=vmem, size = 0x1000, scoped, tag = 'scratch operand']
  #allocation3 [shape = 'f32[8,128]{1,0:T(8,128)}', space=vmem, size = 0x1000, scoped, tag = 'scratch operand']
  #allocation4 [shape = 'f32[1,128]{1,0:T(1,128)}', space=vmem, size = 0x200, scoped, tag = 'scratch operand']
  #allocation5 [shape = 'f32[1,128]{1,0:T(1,128)}', space=vmem, size = 0x200, scoped, tag = 'scratch operand']
  #allocation6 [shape = 'f32[64,128]{1,0:T(8,128)}', space=vmem, size = 0x8000, scoped, tag = 'scratch operand']
  %s0 = inlined_call_operand.hbm [shape: f32[64,128], index: 0, kind: input, shape index: {}]
  %s1 = inlined_call_operand.hbm [shape: f32[64,128], index: 1, kind: input, shape index: {}]
  %s2 = inlined_call_operand.vmem [shape: f32[1,128], index: 2, kind: input, shape index: {}]
  %s3 = inlined_call_operand.vmem [shape: f32[1,128], index: 3, kind: input, shape index: {}]
  %s4 = inlined_call_operand.vmem [shape: f32[1,128], index: 4, kind: input, shape index: {}]
  %s5 = inlined_call_operand.hbm [shape: f32[64,128], index: 5, kind: output, shape index: {}]
  %s6 = sld [smem:[#allocation0]]
  $region77: #{tpu_custom_call.1} parent=0
    _
  %s8 = ssub.s32 1, %s6
  %s9 = scalar_select 0, %s8, %s6
  $region1: #{tpu_custom_call.1} parent=0
    #allocation7 [shape = 'u8[16384]{0}', space=vmem, size = 0x4000, scoped, tag = 'input window, operand 0']
    #allocation8 [shape = 's32[2]{0}', space=sflag, size = 0x8, scoped, tag = 'scoped memory for tpu_custom_call.1']
    #allocation9 [shape = 's32[2]{0}', space=sflag, size = 0x8, scoped, tag = 'scoped memory for tpu_custom_call.1']
    #allocation10 [shape = 'u8[16384]{0}', space=vmem, size = 0x4000, scoped, tag = 'input window, operand 1']
    #allocation11 [shape = 's32[2]{0}', space=sflag, size = 0x8, scoped, tag = 'scoped memory for tpu_custom_call.1']
    #allocation12 [shape = 'u8[16384]{0}', space=vmem, size = 0x4000, scoped, tag = 'output window, operand 0']
    %10 = vsyncpa [#allocation8], 0
    %s11 = scalar_lea.sflag [#allocation8], 1
    %12 = vsyncpa %s11, 0
    %13 = vsyncpa [#allocation11], 0
    %s14 = scalar_lea.sflag [#allocation11], 1
    %15 = vsyncpa %s14, 0
    %16 = vsyncpa [#allocation9], 0
    %s17 = scalar_lea.sflag [#allocation9], 1
    %18 = vsyncpa %s17, 0
    loop: start=0, step=1, limit=10
    $region2: #{tpu_custom_call.1} parent=1 // loop_pre_header
      _
    $region3: #{tpu_custom_call.1} parent=1 // loop_header
      %s20 = sphi 0, %s24
      %p21 = scmp.ge.s32.totalorder %s20, 10
      %s27 = sphi 0, %s39
      %s28 = sphi 0, %s35
      %s29 = sphi 0, %s27
      %s30 = sphi 0, %s28
      %s31 = sphi 0, %s29
      %s32 = sphi 0, %s30
      %s46 = sphi 0, %s48
      %s49 = sphi 0, %s46
      %s50 = sphi 0, %s49
      %s66 = sphi 0, %s50
      %s76 = sphi 0, %s78
      %s79 = sphi 0, %s76
      %s80 = sphi 0, %s79
      %s96 = sphi 0, %s80
      %s100 = sphi 0, %s100
      %s102 = sphi 0, %s100
      %s103 = sphi 0, %s102
      %s117 = sphi 0, %s103
      %s121 = sphi 0, %s121
      %s123 = sphi 0, %s121
      %s124 = sphi 0, %s123
      %s138 = sphi 0, %s124
      %s142 = sphi 0, %s142
      %s144 = sphi 0, %s142
      %s145 = sphi 0, %s144
      %s159 = sphi 0, %s145
      %s167 = sphi 0, %s169
      %s170 = sphi 0, %s167
      %s171 = sphi 0, %s170
      %s187 = sphi 0, %s171
    $region4: #{tpu_custom_call.1} parent=1 // loop_header_branch
      %23 = sbr.rel (%p21) target = $region8
    $region5: #{tpu_custom_call.1} parent=1 // loop_body
      %s25 = ssub.s32 %s20, 1
      %s26 = ssub.s32 %s20, 2
      %s33 = sadd.s32 1, %s28
      %p34 = scmp.ge.s32.totalorder %s33, 4
      %s35 = scalar_select %p34, 0, %s33
      %s36 = sadd.s32 1, %s27
      %s37 = scalar_select %p34, %s36, %s27
      %p38 = scmp.ge.s32.totalorder %s37, 2
      %s39 = scalar_select %p38, 0, %s37
      %s40 = ssub.s32 1, %s27
      %s41 = smul.u32 %s28, %s40
      %s42 = ssub.s32 1, %s39
      %s43 = smul.u32 %s35, %s42
      %s44 = ssub.s32 %s41, %s43
      %p45 = scmp.eq.s32.totalorder %s44, 0
      %s47 = sadd.s32 %s46, 1
      %s48 = scalar_select %p45, %s46, %s47
      %p51 = pneg %p45
      %p52 = scmp.eq.s32.totalorder %s20, 7
      %p53 = por %p51, %p52
      %p54 = scmp.ne.s32.totalorder %s46, %s49
      %p55 = scmp.eq.s32.totalorder %s20, 0
      %p56 = por %p54, %p55
      %p57 = scmp.ne.s32.totalorder %s46, %s49
      %p58 = scmp.eq.s32.totalorder %s25, 7
      %p59 = por %p57, %p58
      %p60 = scmp.ne.s32.totalorder %s49, %s50
      %p61 = scmp.eq.s32.totalorder %s25, 0
      %p62 = por %p60, %p61
      %p63 = scmp.ne.s32.totalorder %s49, %s50
      %p64 = scmp.eq.s32.totalorder %s26, 7
      %p65 = por %p63, %p64
      %p67 = scmp.ne.s32.totalorder %s50, %s66
      %p68 = scmp.eq.s32.totalorder %s26, 0
      %p69 = por %p67, %p68
      %s70 = ssub.s32 1, %s27
      %s71 = smul.u32 %s28, %s70
      %s72 = ssub.s32 1, %s39
      %s73 = smul.u32 %s35, %s72
      %s74 = ssub.s32 %s71, %s73
      %p75 = scmp.eq.s32.totalorder %s74, 0
      %s77 = sadd.s32 %s76, 1
      %s78 = scalar_select %p75, %s76, %s77
      %p81 = pneg %p75
      %p82 = scmp.eq.s32.totalorder %s20, 7
      %p83 = por %p81, %p82
      %p84 = scmp.ne.s32.totalorder %s76, %s79
      %p85 = scmp.eq.s32.totalorder %s20, 0
      %p86 = por %p84, %p85
      %p87 = scmp.ne.s32.totalorder %s76, %s79
      %p88 = scmp.eq.s32.totalorder %s25, 7
      %p89 = por %p87, %p88
      %p90 = scmp.ne.s32.totalorder %s79, %s80
      %p91 = scmp.eq.s32.totalorder %s25, 0
      %p92 = por %p90, %p91
      %p93 = scmp.ne.s32.totalorder %s79, %s80
      %p94 = scmp.eq.s32.totalorder %s26, 7
      %p95 = por %p93, %p94
      %p97 = scmp.ne.s32.totalorder %s80, %s96
      %p98 = scmp.eq.s32.totalorder %s26, 0
      %p99 = por %p97, %p98
      %s101 = sadd.s32 %s100, 1
      %p104 = scmp.eq.s32.totalorder %s20, 7
      %p105 = scmp.ne.s32.totalorder %s100, %s102
      %p106 = scmp.eq.s32.totalorder %s20, 0
      %p107 = por %p105, %p106
      %p108 = scmp.ne.s32.totalorder %s100, %s102
      %p109 = scmp.eq.s32.totalorder %s25, 7
      %p110 = por %p108, %p109
      %p111 = scmp.ne.s32.totalorder %s102, %s103
      %p112 = scmp.eq.s32.totalorder %s25, 0
      %p113 = por %p111, %p112
      %p114 = scmp.ne.s32.totalorder %s102, %s103
      %p115 = scmp.eq.s32.totalorder %s26, 7
      %p116 = por %p114, %p115
      %p118 = scmp.ne.s32.totalorder %s103, %s117
      %p119 = scmp.eq.s32.totalorder %s26, 0
      %p120 = por %p118, %p119
      %s122 = sadd.s32 %s121, 1
      %p125 = scmp.eq.s32.totalorder %s20, 7
      %p126 = scmp.ne.s32.totalorder %s121, %s123
      %p127 = scmp.eq.s32.totalorder %s20, 0
      %p128 = por %p126, %p127
      %p129 = scmp.ne.s32.totalorder %s121, %s123
      %p130 = scmp.eq.s32.totalorder %s25, 7
      %p131 = por %p129, %p130
      %p132 = scmp.ne.s32.totalorder %s123, %s124
      %p133 = scmp.eq.s32.totalorder %s25, 0
      %p134 = por %p132, %p133
      %p135 = scmp.ne.s32.totalorder %s123, %s124
      %p136 = scmp.eq.s32.totalorder %s26, 7
      %p137 = por %p135, %p136
      %p139 = scmp.ne.s32.totalorder %s124, %s138
      %p140 = scmp.eq.s32.totalorder %s26, 0
      %p141 = por %p139, %p140
      %s143 = sadd.s32 %s142, 1
      %p146 = scmp.eq.s32.totalorder %s20, 7
      %p147 = scmp.ne.s32.totalorder %s142, %s144
      %p148 = scmp.eq.s32.totalorder %s20, 0
      %p149 = por %p147, %p148
      %p150 = scmp.ne.s32.totalorder %s142, %s144
      %p151 = scmp.eq.s32.totalorder %s25, 7
      %p152 = por %p150, %p151
      %p153 = scmp.ne.s32.totalorder %s144, %s145
      %p154 = scmp.eq.s32.totalorder %s25, 0
      %p155 = por %p153, %p154
      %p156 = scmp.ne.s32.totalorder %s144, %s145
      %p157 = scmp.eq.s32.totalorder %s26, 7
      %p158 = por %p156, %p157
      %p160 = scmp.ne.s32.totalorder %s145, %s159
      %p161 = scmp.eq.s32.totalorder %s26, 0
      %p162 = por %p160, %p161
      %s163 = smul.u32 %s28, %s27
      %s164 = smul.u32 %s35, %s39
      %s165 = ssub.s32 %s163, %s164
      %p166 = scmp.eq.s32.totalorder %s165, 0
      %s168 = sadd.s32 %s167, 1
      %s169 = scalar_select %p166, %s167, %s168
      %p172 = pneg %p166
      %p173 = scmp.eq.s32.totalorder %s20, 7
      %p174 = por %p172, %p173
      %p175 = scmp.ne.s32.totalorder %s167, %s170
      %p176 = scmp.eq.s32.totalorder %s20, 0
      %p177 = por %p175, %p176
      %p178 = scmp.ne.s32.totalorder %s167, %s170
      %p179 = scmp.eq.s32.totalorder %s25, 7
      %p180 = por %p178, %p179
      %p181 = scmp.ne.s32.totalorder %s170, %s171
      %p182 = scmp.eq.s32.totalorder %s25, 0
      %p183 = por %p181, %p182
      %p184 = scmp.ne.s32.totalorder %s170, %s171
      %p185 = scmp.eq.s32.totalorder %s26, 7
      %p186 = por %p184, %p185
      %p188 = scmp.ne.s32.totalorder %s171, %s187
      %p189 = scmp.eq.s32.totalorder %s26, 0
      %p190 = por %p188, %p189
      %p191 = scmp.le.s32.totalorder 1, %s20
      %p192 = scmp.lt.s32.totalorder %s20, 9
      %p193 = pnand %p191, %p192
      %p194 = pneg %p193
      // Predicated region
      $region9: #{tpu_custom_call.1} parent=5 // pred_check
        _
      $region10: #{tpu_custom_call.1} parent=5 // pred_check_branch
        %196 = sbr.rel (%p193) target = $region12
      $region11: #{tpu_custom_call.1} parent=5 // pred_region
        %s197 = ssub.s32 %s20, 1
        // Predicated region
        $region13: #{tpu_custom_call.1} parent=11 // pred_check
          %p198 = pneg %p113
        $region14: #{tpu_custom_call.1} parent=11 // pred_check_branch
          %200 = sbr.rel (%p198) target = $region16
        $region15: #{tpu_custom_call.1} parent=11 // pred_region
          _
        $region16: #{tpu_custom_call.1} parent=11 // pred_fallthru
          _
        // Predicated region
        $region17: #{tpu_custom_call.1} parent=11 // pred_check
          %p201 = pneg %p134
        $region18: #{tpu_custom_call.1} parent=11 // pred_check_branch
          %203 = sbr.rel (%p201) target = $region20
        $region19: #{tpu_custom_call.1} parent=11 // pred_region
          _
        $region20: #{tpu_custom_call.1} parent=11 // pred_fallthru
          _
        // Predicated region
        $region21: #{tpu_custom_call.1} parent=11 // pred_check
          %p204 = pneg %p155
        $region22: #{tpu_custom_call.1} parent=11 // pred_check_branch
          %206 = sbr.rel (%p204) target = $region24
        $region23: #{tpu_custom_call.1} parent=11 // pred_region
          _
        $region24: #{tpu_custom_call.1} parent=11 // pred_fallthru
          _
      $region12: #{tpu_custom_call.1} parent=5 // pred_fallthru
        _
      %p207 = scmp.lt.s32.totalorder %s20, 8
      // Predicated region
      $region25: #{tpu_custom_call.1} parent=5 // pred_check
        %p208 = pneg %p207
      $region26: #{tpu_custom_call.1} parent=5 // pred_check_branch
        %210 = sbr.rel (%p208) target = $region28
      $region27: #{tpu_custom_call.1} parent=5 // pred_region
        // Predicated region
        $region29: #{tpu_custom_call.1} parent=27 // pred_check
          %p211 = pneg %p56
        $region30: #{tpu_custom_call.1} parent=27 // pred_check_branch
          %213 = sbr.rel (%p211) target = $region32
        $region31: #{tpu_custom_call.1} parent=27 // pred_region
          %s214 = sand.u32 %s46, 1
          %s215 = scalar_lea.sflag [#allocation8], %s214
          %s216 = sand.u32 %s46, 1
          %s217 = smul.addr %s216, 16
          %s218 = scalar_lea.vmem [#allocation7], %s217
          %s219 = ssub.s32 1, %s27
          %s220 = smul.u32 %s28, %s219
          %s221 = smul.u32 2, %s220
          %s223 = ssub.s32 256, 256
          %224 = vsyncadd %s215, %s223
          %s225 = smul.addr %s221, 128
          %s226 = scalar_lea.hbm %s0, %s225
          %s227 = sshll.u32 %s218, 4
          %s228 = int_to_ptr.vmem [resolvable:$true] %s227
          %233 = dma.hbm_to_vmem [thread:$0]  %s226, 256, %s228, %s215, 128, 128, 8
        $region32: #{tpu_custom_call.1} parent=27 // pred_fallthru
          _
        // Predicated region
        $region33: #{tpu_custom_call.1} parent=27 // pred_check
          %p234 = pneg %p86
        $region34: #{tpu_custom_call.1} parent=27 // pred_check_branch
          %236 = sbr.rel (%p234) target = $region36
        $region35: #{tpu_custom_call.1} parent=27 // pred_region
          %s237 = sand.u32 %s76, 1
          %s238 = scalar_lea.sflag [#allocation11], %s237
          %s239 = sand.u32 %s76, 1
          %s240 = smul.addr %s239, 16
          %s241 = scalar_lea.vmem [#allocation10], %s240
          %s242 = ssub.s32 1, %s27
          %s243 = smul.u32 %s28, %s242
          %s244 = smul.u32 2, %s243
          %s246 = ssub.s32 256, 256
          %247 = vsyncadd %s238, %s246
          %s248 = smul.addr %s244, 128
          %s249 = scalar_lea.hbm %s1, %s248
          %s250 = sshll.u32 %s241, 4
          %s251 = int_to_ptr.vmem [resolvable:$true] %s250
          %256 = dma.hbm_to_vmem [thread:$0]  %s249, 256, %s251, %s238, 128, 128, 8
        $region36: #{tpu_custom_call.1} parent=27 // pred_fallthru
          _
      $region28: #{tpu_custom_call.1} parent=5 // pred_fallthru
        _
      %p257 = scmp.le.s32.totalorder 1, %s20
      %p258 = scmp.lt.s32.totalorder %s20, 9
      %p259 = pnand %p257, %p258
      %p260 = pneg %p259
      // Predicated region
      $region37: #{tpu_custom_call.1} parent=5 // pred_check
        _
      $region38: #{tpu_custom_call.1} parent=5 // pred_check_branch
        %262 = sbr.rel (%p259) target = $region40
      $region39: #{tpu_custom_call.1} parent=5 // pred_region
        %s263 = ssub.s32 %s20, 1
        %s264 = sand.u32 %s49, 1
        %s265 = scalar_lea.sflag [#allocation8], %s264
        %s266 = sand.u32 %s49, 1
        %s267 = smul.addr %s266, 16
        %s268 = scalar_lea.vmem [#allocation7], %s267
        // Predicated region
        $region41: #{tpu_custom_call.1} parent=39 // pred_check
          %p269 = pneg %p62
        $region42: #{tpu_custom_call.1} parent=39 // pred_check_branch
          %271 = sbr.rel (%p269) target = $region44
        $region43: #{tpu_custom_call.1} parent=39 // pred_region
          %272 = dma.done %s265, 256
        $region44: #{tpu_custom_call.1} parent=39 // pred_fallthru
          _
        %s273 = sand.u32 %s79, 1
        %s274 = scalar_lea.sflag [#allocation11], %s273
        %s275 = sand.u32 %s79, 1
        %s276 = smul.addr %s275, 16
        %s277 = scalar_lea.vmem [#allocation10], %s276
        // Predicated region
        $region45: #{tpu_custom_call.1} parent=39 // pred_check
          %p278 = pneg %p92
        $region46: #{tpu_custom_call.1} parent=39 // pred_check_branch
          %280 = sbr.rel (%p278) target = $region48
        $region47: #{tpu_custom_call.1} parent=39 // pred_region
          %281 = dma.done %s274, 256
        $region48: #{tpu_custom_call.1} parent=39 // pred_fallthru
          _
        %s282 = sand.u32 %s49, 1
        %s283 = scalar_lea.sflag [#allocation8], %s282
        %s284 = sand.u32 %s49, 1
        %s285 = smul.addr %s284, 16
        %s286 = scalar_lea.vmem [#allocation7], %s285
        %p287 = pneg %p62
        %p288 = pneg %p59
        %s289 = sand.u32 %s79, 1
        %s290 = scalar_lea.sflag [#allocation11], %s289
        %s291 = sand.u32 %s79, 1
        %s292 = smul.addr %s291, 16
        %s293 = scalar_lea.vmem [#allocation10], %s292
        %p294 = pneg %p92
        %p295 = pneg %p89
        %p296 = pneg %p113
        %p297 = pneg %p110
        %p298 = pneg %p134
        %p299 = pneg %p131
        %p300 = pneg %p155
        %p301 = pneg %p152
        %p302 = pneg %p183
        %p303 = pneg %p180
        %s304 = sand.u32 %s170, 1
        %s305 = scalar_lea.sflag [#allocation9], %s304
        %s306 = sand.u32 %s170, 1
        %s307 = smul.addr %s306, 16
        %s308 = scalar_lea.vmem [#allocation12], %s307
        %s309 = ssub.s32 1, %s29
        %s310 = smul.u32 %s30, %s309
        %s311 = smul.u32 2, %s310
        %s312 = ssub.s32 1, %s29
        %s313 = smul.u32 %s30, %s312
        %s314 = smul.u32 2, %s313
        %s315 = smul.u32 %s30, %s29
        %s316 = smul.u32 2, %s315
        %p317 = scmp.eq.s32.totalorder %s29, 0
        // Predicated region
        $region49: #{tpu_custom_call.1} parent=39 // pred_check
          %p318 = pneg %p317
        $region50: #{tpu_custom_call.1} parent=39 // pred_check_branch
          %320 = sbr.rel (%p318) target = $region52
        $region51: #{tpu_custom_call.1} parent=39 // pred_region
          %p321 = scmp.eq.s32.totalorder %s30, 0
          // Predicated region
          $region53: #{tpu_custom_call.1} parent=51 // pred_check
            %p322 = pneg %p321
          $region54: #{tpu_custom_call.1} parent=51 // pred_check_branch
            %324 = sbr.rel (%p322) target = $region56
          $region55: #{tpu_custom_call.1} parent=51 // pred_region
            %325 = vst [vmem:[#allocation2] sm:$0xff] 0.0
            %326 = vst [vmem:[#allocation3] sm:$0xff] 0.0
          $region56: #{tpu_custom_call.1} parent=51 // pred_fallthru
            _
          %v327 = vld [vmem:[%s268] sm:$0xff]
          %v328 = vld [vmem:[%s268 + $0x8] sm:$0xff]
          %v329 = vld [vmem:[%s277] sm:$0xff]
          %v330 = vld [vmem:[%s277 + $0x8] sm:$0xff]
          %v331 = vadd.f32 %v327, %v329
          %v332 = vadd.f32 %v328, %v330
          %s333 = smul.u32 %s30, 16
          %s334 = scalar_lea.vmem [#allocation6], %s333
          %335 = vst [vmem:[%s334] sm:$0xff] %v331
          %336 = vst [vmem:[%s334 + $0x8] sm:$0xff] %v332
          %v337 = vld [vmem:[%s4] sm:$0x1]
          %v339 = vlaneseq
          %v340 = vshrl.u32 %v339, 7
          %v341 = vsub.s32 0, %v340
          %v342 = vrot.slane %v337, %v341
          %v344 = vsub.f32 %v331, %v342
          %v345 = vsub.f32 %v332, %v342
          %v346 = vld [vmem:[#allocation2] sm:$0xff]
          %v347 = vadd.f32 %v344, %v345
          %v348 = vadd.f32 %v346, %v347
          %349 = vst [vmem:[#allocation2] sm:$0xff] %v348
          %v350 = vld [vmem:[#allocation3] sm:$0xff]
          %v351 = vmul.f32 %v344, %v344
          %v352 = vmul.f32 %v345, %v345
          %v353 = vadd.f32 %v351, %v352
          %v354 = vadd.f32 %v350, %v353
          %355 = vst [vmem:[#allocation3] sm:$0xff] %v354
          %p356 = scmp.eq.s32.totalorder %s30, 3
          // Predicated region
          $region57: #{tpu_custom_call.1} parent=51 // pred_check
            %p357 = pneg %p356
          $region58: #{tpu_custom_call.1} parent=51 // pred_check_branch
            %359 = sbr.rel (%p357) target = $region60
          $region59: #{tpu_custom_call.1} parent=51 // pred_region
            %v360 = vld [vmem:[#allocation2] sm:$0xff]
            %v361 = vld [vmem:[#allocation3] sm:$0xff]
            %362 = vrot.lane.b32.xlu0 %v360, 32
            %v363 = vpop.permute.xlu0 %362
            %v364 = vadd.f32 %v360, %v363
            %365 = vrot.lane.b32.xlu0 %v361, 32
            %v366 = vpop.permute.xlu0 %365
            %v367 = vadd.f32 %v361, %v366
            %368 = vrot.lane.b32.xlu0 %v360, 64
            %v369 = vpop.permute.xlu0 %368
            %v370 = vadd.f32 %v364, %v369
            %371 = vrot.lane.b32.xlu0 %v361, 64
            %v372 = vpop.permute.xlu0 %371
            %v373 = vadd.f32 %v367, %v372
            %374 = vrot.lane.b32.xlu0 %v360, 96
            %v375 = vpop.permute.xlu0 %374
            %v376 = vadd.f32 %v370, %v375
            %377 = vrot.lane.b32.xlu0 %v361, 96
            %v378 = vpop.permute.xlu0 %377
            %v379 = vadd.f32 %v373, %v378
            %v380 = vrot.slane %v376, 4
            %v381 = vadd.f32 %v376, %v380
            %v382 = vrot.slane %v381, 2
            %v383 = vadd.f32 %v381, %v382
            %v384 = vrot.slane %v383, 1
            %v385 = vadd.f32 %v383, %v384
            %v386 = vrot.slane %v379, 4
            %v387 = vadd.f32 %v379, %v386
            %v388 = vrot.slane %v387, 2
            %v389 = vadd.f32 %v387, %v388
            %v390 = vrot.slane %v389, 1
            %v391 = vadd.f32 %v389, %v390
            %v392 = vmul.f32 %v385, 0.00390625
            %v393 = vld [vmem:[%s4] sm:$0x1]
            %v394 = vadd.f32 %v393, %v392
            %v395 = vmul.f32 %v391, 0.00390625
            %v396 = vmul.f32 %v392, %v392
            %v397 = vsub.f32 %v395, %v396
            %v398 = vmax.f32 %v397, 0.0
            %v399 = vld [vmem:[%s2] sm:$0x1]
            %v400 = vadd.f32 %v398, 1e-05
            %v401 = vrsqrt.pop %v400
            %v402 = vmul.f32 %v399, %v401
            %403 = vst [vmem:[#allocation4] sm:$0x1] %v402
            %v404 = vld [vmem:[%s3] sm:$0x1]
            %v405 = vmul.f32 %v394, %v402
            %v406 = vsub.f32 %v404, %v405
            %407 = vst [vmem:[#allocation5] sm:$0x1] %v406
          $region60: #{tpu_custom_call.1} parent=51 // pred_fallthru
            _
        $region52: #{tpu_custom_call.1} parent=39 // pred_fallthru
          _
        %p408 = scmp.eq.s32.totalorder %s29, 1
        // Predicated region
        $region61: #{tpu_custom_call.1} parent=39 // pred_check
          %p409 = pneg %p408
        $region62: #{tpu_custom_call.1} parent=39 // pred_check_branch
          %411 = sbr.rel (%p409) target = $region64
        $region63: #{tpu_custom_call.1} parent=39 // pred_region
          %s412 = smul.u32 %s30, 16
          %s413 = scalar_lea.vmem [#allocation6], %s412
          %v414 = vld [vmem:[%s413] sm:$0xff]
          %v415 = vld [vmem:[%s413 + $0x8] sm:$0xff]
          %v416 = vld [vmem:[#allocation4] sm:$0x1]
          %v418 = vlaneseq
          %v419 = vshrl.u32 %v418, 7
          %v420 = vsub.s32 0, %v419
          %v421 = vrot.slane %v416, %v420
          %v423 = vmul.f32 %v414, %v421
          %v424 = vmul.f32 %v415, %v421
          %v425 = vld [vmem:[#allocation5] sm:$0x1]
          %v427 = vlaneseq
          %v428 = vshrl.u32 %v427, 7
          %v429 = vsub.s32 0, %v428
          %v430 = vrot.slane %v425, %v429
          %v432 = vadd.f32 %v423, %v430
          %v433 = vadd.f32 %v424, %v430
          %434 = vst [vmem:[%s308] sm:$0xff] %v432
          %435 = vst [vmem:[%s308 + $0x8] sm:$0xff] %v433
        $region64: #{tpu_custom_call.1} parent=39 // pred_fallthru
          _
        %s436 = sand.u32 %s170, 1
        %s437 = scalar_lea.sflag [#allocation9], %s436
        %s438 = sand.u32 %s170, 1
        %s439 = smul.addr %s438, 16
        %s440 = scalar_lea.vmem [#allocation12], %s439
        // Predicated region
        $region65: #{tpu_custom_call.1} parent=39 // pred_check
          %p441 = pneg %p180
        $region66: #{tpu_custom_call.1} parent=39 // pred_check_branch
          %443 = sbr.rel (%p441) target = $region68
        $region67: #{tpu_custom_call.1} parent=39 // pred_region
          %s444 = smul.u32 %s30, %s29
          %s445 = smul.u32 2, %s444
          %s447 = ssub.s32 256, 256
          %448 = vsyncadd %s437, %s447
          %s449 = smul.addr %s445, 128
          %s450 = scalar_lea.hbm %s5, %s449
          %s451 = sshll.u32 %s440, 4
          %s452 = int_to_ptr.vmem [resolvable:$true] %s451
          %457 = dma.vmem_to_hbm [thread:$0]  %s452, 256, %s450, %s437, 128, 128, 8
        $region68: #{tpu_custom_call.1} parent=39 // pred_fallthru
          _
      $region40: #{tpu_custom_call.1} parent=5 // pred_fallthru
        _
      %p458 = scmp.le.s32.totalorder 2, %s20
      // Predicated region
      $region69: #{tpu_custom_call.1} parent=5 // pred_check
        %p459 = pneg %p458
      $region70: #{tpu_custom_call.1} parent=5 // pred_check_branch
        %461 = sbr.rel (%p459) target = $region72
      $region71: #{tpu_custom_call.1} parent=5 // pred_region
        %s462 = ssub.s32 %s20, 2
        // Predicated region
        $region73: #{tpu_custom_call.1} parent=71 // pred_check
          %p463 = pneg %p186
        $region74: #{tpu_custom_call.1} parent=71 // pred_check_branch
          %465 = sbr.rel (%p463) target = $region76
        $region75: #{tpu_custom_call.1} parent=71 // pred_region
          %s466 = sand.u32 %s171, 1
          %s467 = scalar_lea.sflag [#allocation9], %s466
          %s468 = sand.u32 %s171, 1
          %s469 = smul.addr %s468, 16
          %s470 = scalar_lea.vmem [#allocation12], %s469
          %471 = dma.done %s467, 256
        $region76: #{tpu_custom_call.1} parent=71 // pred_fallthru
          _
      $region72: #{tpu_custom_call.1} parent=5 // pred_fallthru
        _
    $region6: #{tpu_custom_call.1} parent=1 // loop_footer
      %s24 = sadd.s32 1, %s20
    $region7: #{tpu_custom_call.1} parent=1 // loop_footer_branch
      %19 = sbr.rel target = $region3
    $region8: #{tpu_custom_call.1} parent=1 // loop_exit
      _
    %472 = vsyncpa [#allocation8], 1
    %s473 = scalar_lea.sflag [#allocation8], 1
    %474 = vsyncpa %s473, 1
    %475 = vsyncpa [#allocation11], 1
    %s476 = scalar_lea.sflag [#allocation11], 1
    %477 = vsyncpa %s476, 1
    %478 = vsyncpa [#allocation9], 1
    %s479 = scalar_lea.sflag [#allocation9], 1
    %480 = vsyncpa %s479, 1

</llo_original>
